<compile_context>
chip_gen: v6e
topology: v6e:2x2x1
jax: 0.10.0
libtpu: 0.0.40
codegen_flags: <defaults>
</compile_context>

<pallas_src>
import jax
import jax.numpy as jnp
from jax.experimental import pallas as pl
from jax.experimental.pallas import tpu as pltpu

LANES = 128
MAX_BLOCK_BYTES = 8 * 1024 * 1024          # per-side block size for large inputs
SMALL_SINGLE_BLOCK_BYTES = 256 * 1024      # below this, one block / grid=(1,)
VMEM_LIMIT_BYTES = 48 * 1024 * 1024        # explicit scoped-VMEM budget
MIN_BLOCKS = 4                             # megacore: give v7x's 2 TCs work


def _bintanh_kernel(x_ref, o_ref):
    # Cast in-vreg (free next to HBM traffic); f32 arithmetic keeps the
    # round-half-to-even result identical on all generations.
    x = x_ref[...].astype(jnp.float32)
    hs = jnp.clip((x + 1.0) * 0.5, 0.0, 1.0)       # hard_sigmoid
    y = 2.0 * hs - 1.0
    o_ref[...] = jnp.round(y).astype(o_ref.dtype)  # half-to-even == torch.round


def bintanh(x):
    orig_shape = x.shape
    dtype = x.dtype
    n = x.size
    itemsize = jnp.dtype(dtype).itemsize

    x_flat = jnp.ravel(x)

    # Pick the widest lane-dense last dim that divides n (no pad needed);
    # fall back to 128 + tail pad only when unavoidable.
    width = None
    for cand in (1024, 512, 256, 128):
        if n % cand == 0:
            width = cand
            break
    padded = width is None
    if padded:
        width = LANES
        rows = pl.cdiv(n, width)
        x_flat = jnp.pad(x_flat, (0, rows * width - n))
    else:
        rows = n // width

    x2d = x_flat.reshape(rows, width)

    total_bytes = n * itemsize
    if total_bytes <= SMALL_SINGLE_BLOCK_BYTES:
        # Tiny input: a single block covering the whole array — zero per-step
        # pipeline overhead; block_shape == array shape relaxes (8,128) rules.
        tile_rows = rows
    else:
        # Large input: big lane-dense blocks (multiple of 8 rows), but capped
        # so the grid has >= MIN_BLOCKS blocks for megacore parallelism.
        max_tile_rows = max(8, (MAX_BLOCK_BYTES // (width * itemsize)) // 8 * 8)
        cap = max(8, (pl.cdiv(rows, MIN_BLOCKS) // 8) * 8)
        tile_rows = min(max_tile_rows, cap)

    grid = (pl.cdiv(rows, tile_rows),)   # last partial block is masked by Pallas

    out2d = pl.pallas_call(
        _bintanh_kernel,
        out_shape=jax.ShapeDtypeStruct((rows, width), dtype),
        grid_spec=pltpu.PrefetchScalarGridSpec(
            num_scalar_prefetch=0,
            grid=grid,
            in_specs=[pl.BlockSpec((tile_rows, width), lambda i: (i, 0))],
            out_specs=pl.BlockSpec((tile_rows, width), lambda i: (i, 0)),
        ),
        compiler_params=pltpu.CompilerParams(
            dimension_semantics=("parallel",),
            vmem_limit_bytes=VMEM_LIMIT_BYTES,
        ),
        cost_estimate=pl.CostEstimate(
            flops=6 * n,
            transcendentals=0,
            bytes_accessed=2 * n * itemsize,
        ),
    )(x2d)

    if padded:
        return out2d.reshape(-1)[:n].reshape(orig_shape)
    return out2d.reshape(orig_shape)


if __name__ == "__main__":
    key = jax.random.PRNGKey(0)
    # NCHW input: batch=2, channels=4, spatial=16x16
    x = jax.random.normal(key, (2, 4, 16, 16), dtype=jnp.float32) * 2.0

    out = bintanh(x)
    out = jax.block_until_ready(out)

    # Reference check (plain JAX, literal PyTorch formula).
    ref = jnp.round(2.0 * jnp.clip((x + 1.0) / 2.0, 0.0, 1.0) - 1.0)
    assert out.shape == x.shape and out.dtype == x.dtype
    assert bool(jnp.all(out == ref))

    print("KERNEL_OK")
</pallas_src>

<mosaic_0001>
module attributes {stable_mosaic.version = 11 : i64} {
  func.func @_bintanh_kernel(%arg0: i32, %arg1: memref<2x1024xf32, #tpu.memory_space<vmem>>, %arg2: memref<2x1024xf32, #tpu.memory_space<vmem>>) attributes {dimension_semantics = [#tpu.dimension_semantics<parallel>], iteration_bounds = array<i64: 1>, scalar_prefetch = 0 : i64, scratch_operands = 0 : i64, tpu.core_type = #tpu.core_type<tc>, window_params = [{transform_indices = @transform_0, window_bounds = array<i64: 2, 1024>}, {transform_indices = @transform_1, window_bounds = array<i64: 2, 1024>}]} {
    %c0 = arith.constant 0 : index
    %c0_0 = arith.constant 0 : index
    %0 = vector.load %arg1[%c0, %c0_0] : memref<2x1024xf32, #tpu.memory_space<vmem>>, vector<2x1024xf32>
    %cst = arith.constant 1.000000e+00 : f32
    %1 = vector.broadcast %cst : f32 to vector<2x1024xf32>
    %2 = arith.addf %0, %1 : vector<2x1024xf32>
    %cst_1 = arith.constant 5.000000e-01 : f32
    %3 = vector.broadcast %cst_1 : f32 to vector<2x1024xf32>
    %4 = arith.mulf %2, %3 : vector<2x1024xf32>
    %cst_2 = arith.constant 0.000000e+00 : f32
    %cst_3 = arith.constant 1.000000e+00 : f32
    %5 = vector.broadcast %cst_2 : f32 to vector<2x1024xf32>
    %6 = arith.maximumf %5, %4 : vector<2x1024xf32>
    %7 = vector.broadcast %cst_3 : f32 to vector<2x1024xf32>
    %8 = arith.minimumf %7, %6 : vector<2x1024xf32>
    %cst_4 = arith.constant 2.000000e+00 : f32
    %9 = vector.broadcast %cst_4 : f32 to vector<2x1024xf32>
    %10 = arith.mulf %9, %8 : vector<2x1024xf32>
    %cst_5 = arith.constant 1.000000e+00 : f32
    %11 = vector.broadcast %cst_5 : f32 to vector<2x1024xf32>
    %12 = arith.subf %10, %11 : vector<2x1024xf32>
    %13 = math.roundeven %12 : vector<2x1024xf32>
    %c0_6 = arith.constant 0 : index
    %c0_7 = arith.constant 0 : index
    %14 = vector.load %arg2[%c0_6, %c0_7] : memref<2x1024xf32, #tpu.memory_space<vmem>>, vector<2x1024xf32>
    tpu.vector_store %arg2[%c0_6, %c0_7], %13 {strides = array<i32>} : memref<2x1024xf32, #tpu.memory_space<vmem>>, vector<2x1024xf32>,
    return
  }
  func.func @transform_0(%arg0: i32) -> (i32, i32) {
    %c0_i32 = arith.constant 0 : i32
    %c0_i32_0 = arith.constant 0 : i32
    return %arg0, %c0_i32 : i32, i32
  }
  func.func @transform_1(%arg0: i32) -> (i32, i32) {
    %c0_i32 = arith.constant 0 : i32
    %c0_i32_0 = arith.constant 0 : i32
    return %arg0, %c0_i32 : i32, i32
  }
}

</mosaic_0001>

<llo_original>
// kernel: tpu_custom_call.1
$region0: #{tpu_custom_call.1}
  #allocation0 [shape = 'u32[]', space=smem, size = 0x4, offset = 0x4, fixed_abs, tag = 'smem constant byte address 0x4 - core index']
  #allocation1 [shape = 'u32[144,128]{1,0:T(1,128)}', space=vmem, size = 0x12000, scoped, tag = 'internal scratch']
  %s0 = inlined_call_operand.hbm [shape: f32[2,1024], index: 0, kind: input, shape index: {}]
  %s1 = inlined_call_operand.hbm [shape: f32[2,1024], index: 1, kind: output, shape index: {}]
  %s2 = sld [smem:[#allocation0]]
  $region18: #{tpu_custom_call.1} parent=0
    _
  %s4 = ssub.s32 1, %s2
  %s5 = scalar_select 0, %s4, %s2
  $region1: #{tpu_custom_call.1} parent=0
    #allocation2 [shape = 'u8[8192]{0}', space=vmem, size = 0x2000, scoped, tag = 'input window, operand 0, single buffered']
    #allocation3 [shape = 's32[1]{0}', space=sflag, size = 0x4, scoped, tag = 'scoped memory for tpu_custom_call.1']
    #allocation4 [shape = 's32[1]{0}', space=sflag, size = 0x4, scoped, tag = 'scoped memory for tpu_custom_call.1']
    #allocation5 [shape = 'u8[8192]{0}', space=vmem, size = 0x2000, scoped, tag = 'output window, operand 0, single buffered']
    %6 = vsyncpa [#allocation3], 0
    %7 = vsyncpa [#allocation4], 0
    // Predicated region
    $region2: #{tpu_custom_call.1} parent=1 // pred_check
      _
    $region3: #{tpu_custom_call.1} parent=1 // pred_check_branch
      %9 = sbr.rel (0) target = $region5
    $region4: #{tpu_custom_call.1} parent=1 // pred_region
      %s11 = ssub.s32 256, 256
      %12 = vsyncadd [#allocation3], %s11
      %s14 = sshll.u32 [#allocation2], 4
      %s15 = int_to_ptr.vmem [resolvable:$true] %s14
      %17 = dma.hbm_to_vmem [thread:$0]  %s0, 256, %s15, [#allocation3]
    $region5: #{tpu_custom_call.1} parent=1 // pred_fallthru
      _
    // Predicated region
    $region6: #{tpu_custom_call.1} parent=1 // pred_check
      _
    $region7: #{tpu_custom_call.1} parent=1 // pred_check_branch
      %19 = sbr.rel (0) target = $region9
    $region8: #{tpu_custom_call.1} parent=1 // pred_region
      %20 = dma.done [#allocation3], 256
    $region9: #{tpu_custom_call.1} parent=1 // pred_fallthru
      _
    %v21 = vld [vmem:[#allocation2] sm:$0xff]
    %v22 = vld [vmem:[#allocation2 + $0x8] sm:$0xff]
    %v23 = vadd.f32 %v21, 1.0
    %v24 = vadd.f32 %v22, 1.0
    %v25 = vmul.f32 %v23, 0.5
    %v26 = vmul.f32 %v24, 0.5
    %v27 = vmax.f32 %v25, 0.0
    %v28 = vmax.f32 %v26, 0.0
    %v29 = vmin.f32 %v27, 1.0
    %v30 = vmin.f32 %v28, 1.0
    %v31 = vmul.f32 %v29, 2.0
    %v32 = vmul.f32 %v30, 2.0
    %v33 = vsub.f32 %v31, 1.0
    %v34 = vsub.f32 %v32, 1.0
    %v35 = vround.ne.pseudo %v33
    %v36 = vround.ne.pseudo %v34
    %37 = vst [vmem:[#allocation5] sm:$0xff] %v35
    %38 = vst [vmem:[#allocation5 + $0x8] sm:$0xff] %v36
    // Predicated region
    $region10: #{tpu_custom_call.1} parent=1 // pred_check
      _
    $region11: #{tpu_custom_call.1} parent=1 // pred_check_branch
      %40 = sbr.rel (0) target = $region13
    $region12: #{tpu_custom_call.1} parent=1 // pred_region
      %s42 = ssub.s32 256, 256
      %43 = vsyncadd [#allocation4], %s42
      %s45 = sshll.u32 [#allocation5], 4
      %s46 = int_to_ptr.vmem [resolvable:$true] %s45
      %48 = dma.vmem_to_hbm [thread:$0]  %s46, 256, %s1, [#allocation4]
    $region13: #{tpu_custom_call.1} parent=1 // pred_fallthru
      _
    // Predicated region
    $region14: #{tpu_custom_call.1} parent=1 // pred_check
      _
    $region15: #{tpu_custom_call.1} parent=1 // pred_check_branch
      %50 = sbr.rel (0) target = $region17
    $region16: #{tpu_custom_call.1} parent=1 // pred_region
      %51 = dma.done [#allocation4], 256
    $region17: #{tpu_custom_call.1} parent=1 // pred_fallthru
      _
    %52 = vsyncpa [#allocation3], 1
    %53 = vsyncpa [#allocation4], 1

</llo_original>
